<compile_context>
chip_gen: v7x
topology: tpu7x:2x2x1
jax: 0.10.0
libtpu: 0.0.40
codegen_flags: <defaults>
</compile_context>

<pallas_src>
import functools

import jax
import jax.numpy as jnp
from jax import lax
from jax.experimental import pallas as pl
from jax.experimental.pallas import tpu as pltpu


def _round_up(x, m):
    return ((x + m - 1) // m) * m


def _vmem_capacity_bytes():
    """Generation-aware physical VMEM size; conservative (v7x, 64 MiB) fallback."""
    try:
        cap = int(pltpu.get_tpu_info().vmem_capacity_bytes)
        if cap > 0:
            return cap
    except Exception:
        pass
    return 64 * 1024 * 1024


def _kernel_vmem_bytes(tm, K, E):
    """Corrected VMEM estimate for one grid step (review item 3).

    Counts the double-buffered bf16 streamed blocks, the resident bf16 weight + f32 LN
    params (double-buffer allocation, though the constant index map means only the first
    DMA actually happens), AND the f32 intermediates the body materializes: the (tm, E)
    matmul accumulator plus ~2 more (tm, E)-sized LN temporaries.
    """
    return (2 * tm * (K + E) * 2             # in/out bf16 blocks, double-buffered
            + 2 * (K * E * 2 + 3 * E * 4)    # weight + packed LN params
            + 3 * tm * E * 4)                # f32 accumulator / LN temporaries


def _pick_tm(M, K, E, budget):
    """Per-grid-step row tile: as large as the VMEM budget allows (mem-bound kernel),
    multiple of 16 (bf16 packing), >=128-row floor, never exceeding the problem."""
    tm = 4096                                # big tiles amortize the ~0.35us/step cost
    while tm > 128 and _kernel_vmem_bytes(tm, K, E) > budget:
        tm //= 2
    tm = max(tm, 128)
    if tm >= M:
        return M                             # single step; full-extent block always legal
    return tm


def _vmem_limit_bytes(tm, K, E, cap):
    """Scoped VMEM limit handed to Mosaic: 2x the corrected estimate, at least 16 MiB,
    never more than half the physical VMEM (leaves headroom on v7x's 64 MiB)."""
    need = _kernel_vmem_bytes(tm, K, E)
    return int(min(max(2 * need, 16 * 1024 * 1024), cap // 2))


def _patch_embed_ln_kernel(x_ref, w_ref, p_ref, o_ref):
    # x_ref: (TM, K)  bf16 patch rows (streamed)
    # w_ref: (K,  E)  bf16 projection weight (resident: constant index map)
    # p_ref: (3,  E)  f32  rows = [conv bias, LN gamma, LN beta] (resident)
    # o_ref: (TM, E)  bf16 output rows (streamed, lane-dense when E % 128 == 0)
    params = p_ref[...]
    bias, gamma, beta = params[0:1, :], params[1:2, :], params[2:3, :]

    acc = jnp.dot(x_ref[...], w_ref[...],
                  preferred_element_type=jnp.float32) + bias          # (TM, E) f32

    # LayerNorm in f32, single-sweep moments: var = E[x^2] - mean^2 (biased, as torch).
    inv_e = 1.0 / float(o_ref.shape[-1])
    mean = jnp.sum(acc, axis=-1, keepdims=True) * inv_e
    ex2 = jnp.sum(acc * acc, axis=-1, keepdims=True) * inv_e
    var = ex2 - mean * mean
    inv = lax.rsqrt(var + 1e-5)

    # Single fused normalize / scale / shift / cast pass over the accumulator.
    o_ref[...] = ((acc - mean) * inv * gamma + beta).astype(o_ref.dtype)


def prepare_patch_embed_params(w_conv, b_conv, gamma, beta):
    """One-time (weight-load-time) parameter prep: transpose + bf16-cast the projection
    weight, pack bias/gamma/beta into a single f32 (3, E) operand."""
    E = w_conv.shape[0]
    K = w_conv.shape[1] * w_conv.shape[2] * w_conv.shape[3]
    w_t = jnp.asarray(w_conv, jnp.float32).reshape(E, K).T.astype(jnp.bfloat16)  # (K, E)
    ln = jnp.stack([jnp.asarray(b_conv, jnp.float32),
                    jnp.asarray(gamma, jnp.float32),
                    jnp.asarray(beta, jnp.float32)], axis=0)                      # (3, E)
    return w_t, ln


def patch_conv_embed(x, bs, *, patch_stride, params, tm=None):
    """x: (B, C, H, W) float32.  Returns (bs, B//bs, Hp*Wp, E) bfloat16."""
    w_t, ln = params
    K, E = w_t.shape
    B, C, H, W = x.shape
    ps = patch_stride
    assert H % ps == 0 and W % ps == 0 and C * ps * ps == K
    Hp, Wp = H // ps, W // ps
    M = B * Hp * Wp
    p = B // bs

    # Patch extraction (wrapper side): one XLA pass, bf16 cast fused into the transpose.
    # TODO(synk): fuse into the kernel (see header) to remove this HBM round trip.
    xp = x.astype(jnp.bfloat16).reshape(B, C, Hp, ps, Wp, ps)
    xp = jnp.transpose(xp, (0, 2, 4, 1, 3, 5))            # (B, Hp, Wp, C, ps, ps)
    patches = xp.reshape(M, K)                            # per-patch order = (C, ps, ps)

    cap = _vmem_capacity_bytes()
    if tm is None:
        tm = _pick_tm(M, K, E, budget=min(cap // 3, 32 * 1024 * 1024))
    grid = (pl.cdiv(M, tm),)
    vmem_limit = _vmem_limit_bytes(tm, K, E, cap)

    # NOTE: keep E a multiple of 128 at the model level so the (tm, E) output block is
    # lane-dense; smaller E still runs but falls back to masked (vst.msk) stores.
    out = pl.pallas_call(
        _patch_embed_ln_kernel,
        out_shape=jax.ShapeDtypeStruct((M, E), jnp.bfloat16),
        grid_spec=pltpu.PrefetchScalarGridSpec(
            num_scalar_prefetch=0,
            grid=grid,
            in_specs=[
                pl.BlockSpec((tm, K), lambda i: (i, 0)),   # streamed patch rows
                pl.BlockSpec((K, E), lambda i: (0, 0)),    # invariant: DMA'd once
                pl.BlockSpec((3, E), lambda i: (0, 0)),    # invariant: DMA'd once
            ],
            out_specs=pl.BlockSpec((tm, E), lambda i: (i, 0)),
        ),
        compiler_params=pltpu.CompilerParams(
            # Steps are independent; declared parallel.  We do NOT rely on a 2-TC split
            # (that would need CORE_PARALLEL and hardware verification), so the tile
            # picker never shrinks tiles to manufacture extra grid steps.
            dimension_semantics=("parallel",),
            vmem_limit_bytes=vmem_limit),
    )(patches, w_t, ln)

    return out.reshape(bs, p, Hp * Wp, E)


def _reference(x, bs, patch_stride, w_conv, b_conv, gamma, beta):
    """Pure-JAX reference (conv + LayerNorm), using the same bf16-rounded operands."""
    B, C, H, W = x.shape
    ps = patch_stride
    Hp, Wp = H // ps, W // ps
    E = w_conv.shape[0]
    xr = x.astype(jnp.bfloat16).astype(jnp.float32)
    wr = w_conv.astype(jnp.bfloat16).astype(jnp.float32)
    y = lax.conv_general_dilated(
        xr, wr, window_strides=(ps, ps), padding="VALID",
        dimension_numbers=("NCHW", "OIHW", "NCHW"))
    y = y + b_conv.reshape(1, E, 1, 1)
    y = y.reshape(B, E, Hp * Wp).transpose(0, 2, 1)       # (B, N, E)
    mean = jnp.mean(y, axis=-1, keepdims=True)
    var = jnp.mean((y - mean) ** 2, axis=-1, keepdims=True)
    y = (y - mean) * lax.rsqrt(var + 1e-5) * gamma + beta
    return y.reshape(bs, B // bs, Hp * Wp, E)


if __name__ == "__main__":
    # Small shapes consistent with the module's forward.  embed_dim=128 keeps the
    # output lane-dense (multiple of 128).
    B, C, H, W = 2, 4, 32, 32
    patch_stride = 4
    embed_dim = 128
    bs = 1

    key = jax.random.PRNGKey(0)
    k_x, k_w, k_b, k_g, k_bt = jax.random.split(key, 5)
    x = jax.random.normal(k_x, (B, C, H, W), dtype=jnp.float32)

    # Deterministic parameter init (shapes per nn.Conv2d / nn.LayerNorm in __init__).
    w_conv = jax.random.normal(
        k_w, (embed_dim, C, patch_stride, patch_stride), dtype=jnp.float32) * 0.05
    b_conv = jax.random.normal(k_b, (embed_dim,), dtype=jnp.float32) * 0.05
    gamma = 1.0 + 0.1 * jax.random.normal(k_g, (embed_dim,), dtype=jnp.float32)
    beta = 0.1 * jax.random.normal(k_bt, (embed_dim,), dtype=jnp.float32)

    # One-time parameter prep (outside the per-call path).
    params = prepare_patch_embed_params(w_conv, b_conv, gamma, beta)

    fwd = jax.jit(functools.partial(
        patch_conv_embed, bs=bs, patch_stride=patch_stride))
    out = jax.block_until_ready(fwd(x, params=params))

    Hp, Wp = H // patch_stride, W // patch_stride
    assert out.shape == (bs, B // bs, Hp * Wp, embed_dim)
    assert out.dtype == jnp.bfloat16

    ref = _reference(x, bs, patch_stride, w_conv, b_conv, gamma, beta)
    assert jnp.allclose(out.astype(jnp.float32), ref, atol=3e-2, rtol=3e-2)

    print("KERNEL_OK")
</pallas_src>

<mosaic_0001>
module attributes {stable_mosaic.version = 11 : i64} {
  func.func @_patch_embed_ln_kernel(%arg0: i32, %arg1: memref<128x64xbf16, #tpu.memory_space<vmem>>, %arg2: memref<64x128xbf16, #tpu.memory_space<vmem>>, %arg3: memref<3x128xf32, #tpu.memory_space<vmem>>, %arg4: memref<128x128xbf16, #tpu.memory_space<vmem>>) attributes {dimension_semantics = [#tpu.dimension_semantics<parallel>], iteration_bounds = array<i64: 1>, scalar_prefetch = 0 : i64, scratch_operands = 0 : i64, tpu.core_type = #tpu.core_type<tc>, window_params = [{transform_indices = @transform_0, window_bounds = array<i64: 128, 64>}, {pipeline_mode = #tpu.pipeline_mode<synchronous>, transform_indices = @transform_1, window_bounds = array<i64: 64, 128>}, {pipeline_mode = #tpu.pipeline_mode<synchronous>, transform_indices = @transform_2, window_bounds = array<i64: 3, 128>}, {transform_indices = @transform_3, window_bounds = array<i64: 128, 128>}]} {
    %c0 = arith.constant 0 : index
    %c0_0 = arith.constant 0 : index
    %0 = vector.load %arg3[%c0, %c0_0] : memref<3x128xf32, #tpu.memory_space<vmem>>, vector<3x128xf32>
    %1 = vector.extract_strided_slice %0 {offsets = [0, 0], sizes = [1, 128], strides = [1, 1]} : vector<3x128xf32> to vector<1x128xf32>
    %2 = vector.extract_strided_slice %0 {offsets = [1, 0], sizes = [1, 128], strides = [1, 1]} : vector<3x128xf32> to vector<1x128xf32>
    %3 = vector.extract_strided_slice %0 {offsets = [2, 0], sizes = [1, 128], strides = [1, 1]} : vector<3x128xf32> to vector<1x128xf32>
    %c0_1 = arith.constant 0 : index
    %c0_2 = arith.constant 0 : index
    %4 = vector.load %arg1[%c0_1, %c0_2] : memref<128x64xbf16, #tpu.memory_space<vmem>>, vector<128x64xbf16>
    %c0_3 = arith.constant 0 : index
    %c0_4 = arith.constant 0 : index
    %5 = vector.load %arg2[%c0_3, %c0_4] : memref<64x128xbf16, #tpu.memory_space<vmem>>, vector<64x128xbf16>
    %cst = arith.constant dense<0.000000e+00> : vector<128x128xf32>
    %6 = tpu.matmul %4, %5, %cst {dimension_numbers = #tpu.dot_dimension_numbers<[1], [0], [0], [1], [0, 0, 1, 1], [], []>} : vector<128x64xbf16>, vector<64x128xbf16>, vector<128x128xf32> -> vector<128x128xf32>
    %7 = vector.broadcast %1 : vector<1x128xf32> to vector<128x128xf32>
    %8 = arith.addf %6, %7 : vector<128x128xf32>
    %cst_5 = arith.constant dense<0.000000e+00> : vector<128xf32>
    %9 = vector.multi_reduction <add>, %8, %cst_5 [1] : vector<128x128xf32> to vector<128xf32>
    %10 = vector.shape_cast %9 : vector<128xf32> to vector<128x1xf32>
    %cst_6 = arith.constant 7.812500e-03 : f32
    %11 = vector.broadcast %cst_6 : f32 to vector<128x1xf32>
    %12 = arith.mulf %10, %11 : vector<128x1xf32>
    %13 = arith.mulf %8, %8 : vector<128x128xf32>
    %cst_7 = arith.constant dense<0.000000e+00> : vector<128xf32>
    %14 = vector.multi_reduction <add>, %13, %cst_7 [1] : vector<128x128xf32> to vector<128xf32>
    %15 = vector.shape_cast %14 : vector<128xf32> to vector<128x1xf32>
    %cst_8 = arith.constant 7.812500e-03 : f32
    %16 = vector.broadcast %cst_8 : f32 to vector<128x1xf32>
    %17 = arith.mulf %15, %16 : vector<128x1xf32>
    %18 = arith.mulf %12, %12 : vector<128x1xf32>
    %19 = arith.subf %17, %18 : vector<128x1xf32>
    %cst_9 = arith.constant 9.99999974E-6 : f32
    %20 = vector.broadcast %cst_9 : f32 to vector<128x1xf32>
    %21 = arith.addf %19, %20 : vector<128x1xf32>
    %22 = math.rsqrt %21 : vector<128x1xf32>
    %23 = vector.broadcast %12 : vector<128x1xf32> to vector<128x128xf32>
    %24 = arith.subf %8, %23 : vector<128x128xf32>
    %25 = vector.broadcast %22 : vector<128x1xf32> to vector<128x128xf32>
    %26 = arith.mulf %24, %25 : vector<128x128xf32>
    %27 = vector.broadcast %2 : vector<1x128xf32> to vector<128x128xf32>
    %28 = arith.mulf %26, %27 : vector<128x128xf32>
    %29 = vector.broadcast %3 : vector<1x128xf32> to vector<128x128xf32>
    %30 = arith.addf %28, %29 : vector<128x128xf32>
    %31 = arith.truncf %30 : vector<128x128xf32> to vector<128x128xbf16>
    %c0_10 = arith.constant 0 : index
    %c0_11 = arith.constant 0 : index
    %32 = vector.load %arg4[%c0_10, %c0_11] : memref<128x128xbf16, #tpu.memory_space<vmem>>, vector<128x128xbf16>
    tpu.vector_store %arg4[%c0_10, %c0_11], %31 {strides = array<i32>} : memref<128x128xbf16, #tpu.memory_space<vmem>>, vector<128x128xbf16>,
    return
  }
  func.func @transform_0(%arg0: i32) -> (i32, i32) {
    %c0_i32 = arith.constant 0 : i32
    %c0_i32_0 = arith.constant 0 : i32
    return %arg0, %c0_i32 : i32, i32
  }
  func.func @transform_1(%arg0: i32) -> (i32, i32) {
    %c0_i32 = arith.constant 0 : i32
    %c0_i32_0 = arith.constant 0 : i32
    %c0_i32_1 = arith.constant 0 : i32
    return %c0_i32, %c0_i32_0 : i32, i32
  }
  func.func @transform_2(%arg0: i32) -> (i32, i32) {
    %c0_i32 = arith.constant 0 : i32
    %c0_i32_0 = arith.constant 0 : i32
    %c0_i32_1 = arith.constant 0 : i32
    return %c0_i32, %c0_i32_0 : i32, i32
  }
  func.func @transform_3(%arg0: i32) -> (i32, i32) {
    %c0_i32 = arith.constant 0 : i32
    %c0_i32_0 = arith.constant 0 : i32
    return %arg0, %c0_i32 : i32, i32
  }
}

</mosaic_0001>

<llo_original>
// kernel: patch_conv_embed.1
$region0: #{patch_conv_embed.1}
  #allocation0 [shape = 'u32[]', space=smem, size = 0x4, offset = 0x4, fixed_abs, tag = 'smem constant byte address 0x4 - core index']
  #allocation1 [shape = 'u32[144,128]{1,0:T(1,128)}', space=vmem, size = 0x12000, scoped, tag = 'internal scratch']
  %s0 = inlined_call_operand.vmem [shape: bf16[128,64], index: 0, kind: input, shape index: {}]
  %s1 = inlined_call_operand.vmem [shape: bf16[64,128], index: 1, kind: input, shape index: {}]
  %s2 = inlined_call_operand.vmem [shape: f32[3,128], index: 2, kind: input, shape index: {}]
  %s3 = inlined_call_operand.hbm [shape: bf16[128,128], index: 3, kind: output, shape index: {}]
  %s4 = sld [smem:[#allocation0]]
  $region22: #{patch_conv_embed.1} parent=0
    _
  %s6 = ssub.s32 1, %s4
  %s7 = scalar_select 0, %s6, %s4
  $region1: #{patch_conv_embed.1} parent=0
    #allocation2 [shape = 'u8[32768]{0}', space=vmem, size = 0x8000, scoped, tag = 'output window, operand 0, single buffered']
    #allocation3 [shape = 's32[1]{0}', space=sflag, size = 0x4, scoped, tag = 'scoped memory for patch_conv_embed.1']
    %8 = vsyncpa [#allocation3], 0
    // Predicated region
    $region2: #{patch_conv_embed.1} parent=1 // pred_check
      _
    $region3: #{patch_conv_embed.1} parent=1 // pred_check_branch
      %10 = sbr.rel (0) target = $region5
    $region4: #{patch_conv_embed.1} parent=1 // pred_region
      _
    $region5: #{patch_conv_embed.1} parent=1 // pred_fallthru
      _
    // Predicated region
    $region6: #{patch_conv_embed.1} parent=1 // pred_check
      _
    $region7: #{patch_conv_embed.1} parent=1 // pred_check_branch
      %12 = sbr.rel (0) target = $region9
    $region8: #{patch_conv_embed.1} parent=1 // pred_region
      _
    $region9: #{patch_conv_embed.1} parent=1 // pred_fallthru
      _
    // Predicated region
    $region10: #{patch_conv_embed.1} parent=1 // pred_check
      _
    $region11: #{patch_conv_embed.1} parent=1 // pred_check_branch
      %14 = sbr.rel (0) target = $region13
    $region12: #{patch_conv_embed.1} parent=1 // pred_region
      _
    $region13: #{patch_conv_embed.1} parent=1 // pred_fallthru
      _
    %v16 = vld [vmem:[%s2] sm:$0x7]
    %v17 = vld [vmem:[%s0] sm:$0xf]
    %v18 = vld [vmem:[%s0 + $0x4] sm:$0xf]
    %v19 = vld [vmem:[%s0 + $0x8] sm:$0xf]
    %v20 = vld [vmem:[%s0 + $0xc] sm:$0xf]
    %v21 = vld [vmem:[%s0 + $0x10] sm:$0xf]
    %v22 = vld [vmem:[%s0 + $0x14] sm:$0xf]
    %v23 = vld [vmem:[%s0 + $0x18] sm:$0xf]
    %v24 = vld [vmem:[%s0 + $0x1c] sm:$0xf]
    %v25 = vld [vmem:[%s0 + $0x20] sm:$0xf]
    %v26 = vld [vmem:[%s0 + $0x24] sm:$0xf]
    %v27 = vld [vmem:[%s0 + $0x28] sm:$0xf]
    %v28 = vld [vmem:[%s0 + $0x2c] sm:$0xf]
    %v29 = vld [vmem:[%s0 + $0x30] sm:$0xf]
    %v30 = vld [vmem:[%s0 + $0x34] sm:$0xf]
    %v31 = vld [vmem:[%s0 + $0x38] sm:$0xf]
    %v32 = vld [vmem:[%s0 + $0x3c] sm:$0xf]
    %v33 = vld [vmem:[%s1] sm:$0xf]
    %v34 = vld [vmem:[%s1 + $0x4] sm:$0xf]
    %v35 = vld [vmem:[%s1 + $0x8] sm:$0xf]
    %v36 = vld [vmem:[%s1 + $0xc] sm:$0xf]
    %v37 = vld [vmem:[%s1 + $0x10] sm:$0xf]
    %v38 = vld [vmem:[%s1 + $0x14] sm:$0xf]
    %v39 = vld [vmem:[%s1 + $0x18] sm:$0xf]
    %v40 = vld [vmem:[%s1 + $0x1c] sm:$0xf]
    %v41 = vlaneseq
    %v42 = vshrl.u32 %v41, 7
    %v43 = vsub.s32 0, %v42
    %v44 = vrot.slane %v16, %v43
    %v61 = vunpack.c.l.b16 %v17
    %v62 = vunpack.c.l.b16 %v18
    %v63 = vunpack.c.l.b16 %v19
    %v64 = vunpack.c.l.b16 %v20
    %v65 = vunpack.c.l.b16 %v21
    %v66 = vunpack.c.l.b16 %v22
    %v67 = vunpack.c.l.b16 %v23
    %v68 = vunpack.c.l.b16 %v24
    %v69 = vunpack.c.l.b16 %v25
    %v70 = vunpack.c.l.b16 %v26
    %v71 = vunpack.c.l.b16 %v27
    %v72 = vunpack.c.l.b16 %v28
    %v73 = vunpack.c.l.b16 %v29
    %v74 = vunpack.c.l.b16 %v30
    %v75 = vunpack.c.l.b16 %v31
    %v76 = vunpack.c.l.b16 %v32
    %v77 = vpack.c.b16 %v62, %v61
    %v78 = vpack.c.b16 %v64, %v63
    %v79 = vpack.c.b16 %v66, %v65
    %v80 = vpack.c.b16 %v68, %v67
    %v81 = vpack.c.b16 %v70, %v69
    %v82 = vpack.c.b16 %v72, %v71
    %v83 = vpack.c.b16 %v74, %v73
    %v84 = vpack.c.b16 %v76, %v75
    %v93 = vunpack.c.l.b16 %v33
    %v94 = vunpack.c.l.b16 %v34
    %v95 = vunpack.c.l.b16 %v35
    %v96 = vunpack.c.l.b16 %v36
    %v97 = vunpack.c.l.b16 %v37
    %v98 = vunpack.c.l.b16 %v38
    %v99 = vunpack.c.l.b16 %v39
    %v100 = vunpack.c.l.b16 %v40
    %v101 = vpack.c.b16 %v94, %v93
    %v102 = vpack.c.b16 %v96, %v95
    %v103 = vpack.c.b16 %v98, %v97
    %v104 = vpack.c.b16 %v100, %v99
    %vm109 = vcmask 523264
    %v111 = vsel %vm109, %v77, 0
    %v114 = vsel %vm109, %v78, 0
    %v117 = vsel %vm109, %v79, 0
    %v120 = vsel %vm109, %v80, 0
    %v123 = vsel %vm109, %v81, 0
    %v126 = vsel %vm109, %v82, 0
    %v129 = vsel %vm109, %v83, 0
    %v132 = vsel %vm109, %v84, 0
    %134 = vmatprep.subr.bf16.mxu0 0
    %135 = vmatpush1.bf16.msra.mxu0 %v101
    %136 = vmatprep.subr.bf16.mxu0 0
    %137 = vmatpush1.bf16.msra.mxu0 %v102
    %138 = vmatprep.subr.bf16.mxu0 0
    %139 = vmatpush1.bf16.msra.mxu0 %v103
    %140 = vmatprep.subr.bf16.mxu0 0
    %141 = vmatpush1.bf16.msra.mxu0 %v104
    %142 = vmatprep.subr.bf16.mxu0 0
    %143 = vmatpush1.bf16.msra.mxu0 0
    %144 = vmatprep.subr.bf16.mxu0 0
    %145 = vmatpush1.bf16.msra.mxu0 0
    %146 = vmatprep.subr.bf16.mxu0 0
    %147 = vmatpush1.bf16.msra.mxu0 0
    %148 = vmatprep.subr.bf16.mxu0 0
    %149 = vmatpush1.bf16.msra.mxu0 0
    %150 = vmatprep.subr.bf16.mxu0 0
    %151 = vmatpush1.bf16.msra.mxu0 0
    %152 = vmatprep.subr.bf16.mxu0 0
    %153 = vmatpush1.bf16.msra.mxu0 0
    %154 = vmatprep.subr.bf16.mxu0 0
    %155 = vmatpush1.bf16.msra.mxu0 0
    %156 = vmatprep.subr.bf16.mxu0 0
    %157 = vmatpush1.bf16.msra.mxu0 0
    %158 = vmatprep.subr.bf16.mxu0 0
    %159 = vmatpush1.bf16.msra.mxu0 0
    %160 = vmatprep.subr.bf16.mxu0 0
    %161 = vmatpush1.bf16.msra.mxu0 0
    %162 = vmatprep.subr.bf16.mxu0 0
    %163 = vmatpush1.bf16.msra.mxu0 0
    %164 = vmatprep.subr.bf16.mxu0 0
    %165 = vmatpush1.bf16.msra.mxu0 0
    %166 = vmatprep.mubr.bf16.mxu0 0
    %167 = vmatmul.mubr.bf16.gmra.mrb[0].mxu0 %v111
    %v168 = vpop.f32.mrb[0].mxu0
    %v169 = vadd.f32 %v44, %v168
    %v170 = vpop.f32.mrb[0].mxu0
    %v171 = vpop.f32.mrb[0].mxu0
    %v172 = vadd.f32 %v44, %v171
    %v173 = vpop.f32.mrb[0].mxu0
    %174 = vmatprep.mubr.bf16.mxu0 0
    %175 = vmatmul.mubr.bf16.gmra.mrb[0].mxu0 %v114
    %v176 = vpop.f32.mrb[0].mxu0
    %v177 = vadd.f32 %v44, %v176
    %v178 = vpop.f32.mrb[0].mxu0
    %v179 = vpop.f32.mrb[0].mxu0
    %v180 = vadd.f32 %v44, %v179
    %v181 = vpop.f32.mrb[0].mxu0
    %182 = vmatprep.mubr.bf16.mxu0 0
    %183 = vmatmul.mubr.bf16.gmra.mrb[0].mxu0 %v117
    %v184 = vpop.f32.mrb[0].mxu0
    %v185 = vadd.f32 %v44, %v184
    %v186 = vpop.f32.mrb[0].mxu0
    %v187 = vpop.f32.mrb[0].mxu0
    %v188 = vadd.f32 %v44, %v187
    %v189 = vpop.f32.mrb[0].mxu0
    %190 = vmatprep.mubr.bf16.mxu0 0
    %191 = vmatmul.mubr.bf16.gmra.mrb[0].mxu0 %v120
    %v192 = vpop.f32.mrb[0].mxu0
    %v193 = vadd.f32 %v44, %v192
    %v194 = vpop.f32.mrb[0].mxu0
    %v195 = vpop.f32.mrb[0].mxu0
    %v196 = vadd.f32 %v44, %v195
    %v197 = vpop.f32.mrb[0].mxu0
    %198 = vmatprep.mubr.bf16.mxu0 0
    %199 = vmatmul.mubr.bf16.gmra.mrb[0].mxu0 %v123
    %v200 = vpop.f32.mrb[0].mxu0
    %v201 = vadd.f32 %v44, %v200
    %v202 = vpop.f32.mrb[0].mxu0
    %v203 = vpop.f32.mrb[0].mxu0
    %v204 = vadd.f32 %v44, %v203
    %v205 = vpop.f32.mrb[0].mxu0
    %206 = vmatprep.mubr.bf16.mxu0 0
    %207 = vmatmul.mubr.bf16.gmra.mrb[0].mxu0 %v126
    %v208 = vpop.f32.mrb[0].mxu0
    %v209 = vadd.f32 %v44, %v208
    %v210 = vpop.f32.mrb[0].mxu0
    %v211 = vpop.f32.mrb[0].mxu0
    %v212 = vadd.f32 %v44, %v211
    %v213 = vpop.f32.mrb[0].mxu0
    %214 = vmatprep.mubr.bf16.mxu0 0
    %215 = vmatmul.mubr.bf16.gmra.mrb[0].mxu0 %v129
    %v216 = vpop.f32.mrb[0].mxu0
    %v217 = vadd.f32 %v44, %v216
    %v218 = vpop.f32.mrb[0].mxu0
    %v219 = vpop.f32.mrb[0].mxu0
    %v220 = vadd.f32 %v44, %v219
    %v221 = vpop.f32.mrb[0].mxu0
    %222 = vmatprep.mubr.bf16.mxu0 0
    %223 = vmatmul.mubr.bf16.gmra.mrb[0].mxu0 %v132
    %v224 = vpop.f32.mrb[0].mxu0
    %v225 = vadd.f32 %v44, %v224
    %v226 = vpop.f32.mrb[0].mxu0
    %v227 = vpop.f32.mrb[0].mxu0
    %v228 = vadd.f32 %v44, %v227
    %v229 = vpop.f32.mrb[0].mxu0
    %230 = vdwg.mxu0
    %231 = vadd.xlane.f32.xlu0 %v169
    %v232 = vpop.xlane.xlu0 %231
    %233 = vadd.xlane.f32.xlu0 %v172
    %v234 = vpop.xlane.xlu0 %233
    %235 = vadd.xlane.f32.xlu0 %v177
    %v236 = vpop.xlane.xlu0 %235
    %237 = vadd.xlane.f32.xlu0 %v180
    %v238 = vpop.xlane.xlu0 %237
    %239 = vadd.xlane.f32.xlu0 %v185
    %v240 = vpop.xlane.xlu0 %239
    %241 = vadd.xlane.f32.xlu0 %v188
    %v242 = vpop.xlane.xlu0 %241
    %243 = vadd.xlane.f32.xlu0 %v193
    %v244 = vpop.xlane.xlu0 %243
    %245 = vadd.xlane.f32.xlu0 %v196
    %v246 = vpop.xlane.xlu0 %245
    %247 = vadd.xlane.f32.xlu0 %v201
    %v248 = vpop.xlane.xlu0 %247
    %249 = vadd.xlane.f32.xlu0 %v204
    %v250 = vpop.xlane.xlu0 %249
    %251 = vadd.xlane.f32.xlu0 %v209
    %v252 = vpop.xlane.xlu0 %251
    %253 = vadd.xlane.f32.xlu0 %v212
    %v254 = vpop.xlane.xlu0 %253
    %255 = vadd.xlane.f32.xlu0 %v217
    %v256 = vpop.xlane.xlu0 %255
    %257 = vadd.xlane.f32.xlu0 %v220
    %v258 = vpop.xlane.xlu0 %257
    %259 = vadd.xlane.f32.xlu0 %v225
    %v260 = vpop.xlane.xlu0 %259
    %261 = vadd.xlane.f32.xlu0 %v228
    %v262 = vpop.xlane.xlu0 %261
    %v263 = vmul.f32 %v232, 0.0078125
    %v264 = vmul.f32 %v234, 0.0078125
    %v265 = vmul.f32 %v236, 0.0078125
    %v266 = vmul.f32 %v238, 0.0078125
    %v267 = vmul.f32 %v240, 0.0078125
    %v268 = vmul.f32 %v242, 0.0078125
    %v269 = vmul.f32 %v244, 0.0078125
    %v270 = vmul.f32 %v246, 0.0078125
    %v271 = vmul.f32 %v248, 0.0078125
    %v272 = vmul.f32 %v250, 0.0078125
    %v273 = vmul.f32 %v252, 0.0078125
    %v274 = vmul.f32 %v254, 0.0078125
    %v275 = vmul.f32 %v256, 0.0078125
    %v276 = vmul.f32 %v258, 0.0078125
    %v277 = vmul.f32 %v260, 0.0078125
    %v278 = vmul.f32 %v262, 0.0078125
    %v279 = vmul.f32 %v169, %v169
    %v280 = vmul.f32 %v172, %v172
    %v281 = vmul.f32 %v177, %v177
    %v282 = vmul.f32 %v180, %v180
    %v283 = vmul.f32 %v185, %v185
    %v284 = vmul.f32 %v188, %v188
    %v285 = vmul.f32 %v193, %v193
    %v286 = vmul.f32 %v196, %v196
    %v287 = vmul.f32 %v201, %v201
    %v288 = vmul.f32 %v204, %v204
    %v289 = vmul.f32 %v209, %v209
    %v290 = vmul.f32 %v212, %v212
    %v291 = vmul.f32 %v217, %v217
    %v292 = vmul.f32 %v220, %v220
    %v293 = vmul.f32 %v225, %v225
    %v294 = vmul.f32 %v228, %v228
    %295 = vadd.xlane.f32.xlu0 %v279
    %v296 = vpop.xlane.xlu0 %295
    %297 = vadd.xlane.f32.xlu0 %v280
    %v298 = vpop.xlane.xlu0 %297
    %299 = vadd.xlane.f32.xlu0 %v281
    %v300 = vpop.xlane.xlu0 %299
    %301 = vadd.xlane.f32.xlu0 %v282
    %v302 = vpop.xlane.xlu0 %301
    %303 = vadd.xlane.f32.xlu0 %v283
    %v304 = vpop.xlane.xlu0 %303
    %305 = vadd.xlane.f32.xlu0 %v284
    %v306 = vpop.xlane.xlu0 %305
    %307 = vadd.xlane.f32.xlu0 %v285
    %v308 = vpop.xlane.xlu0 %307
    %309 = vadd.xlane.f32.xlu0 %v286
    %v310 = vpop.xlane.xlu0 %309
    %311 = vadd.xlane.f32.xlu0 %v287
    %v312 = vpop.xlane.xlu0 %311
    %313 = vadd.xlane.f32.xlu0 %v288
    %v314 = vpop.xlane.xlu0 %313
    %315 = vadd.xlane.f32.xlu0 %v289
    %v316 = vpop.xlane.xlu0 %315
    %317 = vadd.xlane.f32.xlu0 %v290
    %v318 = vpop.xlane.xlu0 %317
    %319 = vadd.xlane.f32.xlu0 %v291
    %v320 = vpop.xlane.xlu0 %319
    %321 = vadd.xlane.f32.xlu0 %v292
    %v322 = vpop.xlane.xlu0 %321
    %323 = vadd.xlane.f32.xlu0 %v293
    %v324 = vpop.xlane.xlu0 %323
    %325 = vadd.xlane.f32.xlu0 %v294
    %v326 = vpop.xlane.xlu0 %325
    %v327 = vmul.f32 %v296, 0.0078125
    %v328 = vmul.f32 %v298, 0.0078125
    %v329 = vmul.f32 %v300, 0.0078125
    %v330 = vmul.f32 %v302, 0.0078125
    %v331 = vmul.f32 %v304, 0.0078125
    %v332 = vmul.f32 %v306, 0.0078125
    %v333 = vmul.f32 %v308, 0.0078125
    %v334 = vmul.f32 %v310, 0.0078125
    %v335 = vmul.f32 %v312, 0.0078125
    %v336 = vmul.f32 %v314, 0.0078125
    %v337 = vmul.f32 %v316, 0.0078125
    %v338 = vmul.f32 %v318, 0.0078125
    %v339 = vmul.f32 %v320, 0.0078125
    %v340 = vmul.f32 %v322, 0.0078125
    %v341 = vmul.f32 %v324, 0.0078125
    %v342 = vmul.f32 %v326, 0.0078125
    %v343 = vmul.f32 %v263, %v263
    %v344 = vmul.f32 %v264, %v264
    %v345 = vmul.f32 %v265, %v265
    %v346 = vmul.f32 %v266, %v266
    %v347 = vmul.f32 %v267, %v267
    %v348 = vmul.f32 %v268, %v268
    %v349 = vmul.f32 %v269, %v269
    %v350 = vmul.f32 %v270, %v270
    %v351 = vmul.f32 %v271, %v271
    %v352 = vmul.f32 %v272, %v272
    %v353 = vmul.f32 %v273, %v273
    %v354 = vmul.f32 %v274, %v274
    %v355 = vmul.f32 %v275, %v275
    %v356 = vmul.f32 %v276, %v276
    %v357 = vmul.f32 %v277, %v277
    %v358 = vmul.f32 %v278, %v278
    %v359 = vsub.f32 %v327, %v343
    %v360 = vsub.f32 %v328, %v344
    %v361 = vsub.f32 %v329, %v345
    %v362 = vsub.f32 %v330, %v346
    %v363 = vsub.f32 %v331, %v347
    %v364 = vsub.f32 %v332, %v348
    %v365 = vsub.f32 %v333, %v349
    %v366 = vsub.f32 %v334, %v350
    %v367 = vsub.f32 %v335, %v351
    %v368 = vsub.f32 %v336, %v352
    %v369 = vsub.f32 %v337, %v353
    %v370 = vsub.f32 %v338, %v354
    %v371 = vsub.f32 %v339, %v355
    %v372 = vsub.f32 %v340, %v356
    %v373 = vsub.f32 %v341, %v357
    %v374 = vsub.f32 %v342, %v358
    %v375 = vadd.f32 %v359, 1e-05
    %v376 = vadd.f32 %v360, 1e-05
    %v377 = vadd.f32 %v361, 1e-05
    %v378 = vadd.f32 %v362, 1e-05
    %v379 = vadd.f32 %v363, 1e-05
    %v380 = vadd.f32 %v364, 1e-05
    %v381 = vadd.f32 %v365, 1e-05
    %v382 = vadd.f32 %v366, 1e-05
    %v383 = vadd.f32 %v367, 1e-05
    %v384 = vadd.f32 %v368, 1e-05
    %v385 = vadd.f32 %v369, 1e-05
    %v386 = vadd.f32 %v370, 1e-05
    %v387 = vadd.f32 %v371, 1e-05
    %v388 = vadd.f32 %v372, 1e-05
    %v389 = vadd.f32 %v373, 1e-05
    %v390 = vadd.f32 %v374, 1e-05
    %v391 = vrsqrt.pop %v375
    %v392 = vrsqrt.pop %v376
    %v393 = vrsqrt.pop %v377
    %v394 = vrsqrt.pop %v378
    %v395 = vrsqrt.pop %v379
    %v396 = vrsqrt.pop %v380
    %v397 = vrsqrt.pop %v381
    %v398 = vrsqrt.pop %v382
    %v399 = vrsqrt.pop %v383
    %v400 = vrsqrt.pop %v384
    %v401 = vrsqrt.pop %v385
    %v402 = vrsqrt.pop %v386
    %v403 = vrsqrt.pop %v387
    %v404 = vrsqrt.pop %v388
    %v405 = vrsqrt.pop %v389
    %v406 = vrsqrt.pop %v390
    %v407 = vsub.f32 %v169, %v263
    %v408 = vsub.f32 %v172, %v264
    %v409 = vsub.f32 %v177, %v265
    %v410 = vsub.f32 %v180, %v266
    %v411 = vsub.f32 %v185, %v267
    %v412 = vsub.f32 %v188, %v268
    %v413 = vsub.f32 %v193, %v269
    %v414 = vsub.f32 %v196, %v270
    %v415 = vsub.f32 %v201, %v271
    %v416 = vsub.f32 %v204, %v272
    %v417 = vsub.f32 %v209, %v273
    %v418 = vsub.f32 %v212, %v274
    %v419 = vsub.f32 %v217, %v275
    %v420 = vsub.f32 %v220, %v276
    %v421 = vsub.f32 %v225, %v277
    %v422 = vsub.f32 %v228, %v278
    %v423 = vmul.f32 %v407, %v391
    %v424 = vmul.f32 %v408, %v392
    %v425 = vmul.f32 %v409, %v393
    %v426 = vmul.f32 %v410, %v394
    %v427 = vmul.f32 %v411, %v395
    %v428 = vmul.f32 %v412, %v396
    %v429 = vmul.f32 %v413, %v397
    %v430 = vmul.f32 %v414, %v398
    %v431 = vmul.f32 %v415, %v399
    %v432 = vmul.f32 %v416, %v400
    %v433 = vmul.f32 %v417, %v401
    %v434 = vmul.f32 %v418, %v402
    %v435 = vmul.f32 %v419, %v403
    %v436 = vmul.f32 %v420, %v404
    %v437 = vmul.f32 %v421, %v405
    %v438 = vmul.f32 %v422, %v406
    %v439 = vlaneseq
    %v440 = vshrl.u32 %v439, 7
    %v441 = vsub.s32 1, %v440
    %v442 = vrot.slane %v16, %v441
    %v443 = vmul.f32 %v423, %v442
    %v444 = vmul.f32 %v424, %v442
    %v445 = vmul.f32 %v425, %v442
    %v446 = vmul.f32 %v426, %v442
    %v447 = vmul.f32 %v427, %v442
    %v448 = vmul.f32 %v428, %v442
    %v449 = vmul.f32 %v429, %v442
    %v450 = vmul.f32 %v430, %v442
    %v451 = vmul.f32 %v431, %v442
    %v452 = vmul.f32 %v432, %v442
    %v453 = vmul.f32 %v433, %v442
    %v454 = vmul.f32 %v434, %v442
    %v455 = vmul.f32 %v435, %v442
    %v456 = vmul.f32 %v436, %v442
    %v457 = vmul.f32 %v437, %v442
    %v458 = vmul.f32 %v438, %v442
    %v459 = vlaneseq
    %v460 = vshrl.u32 %v459, 7
    %v461 = vsub.s32 2, %v460
    %v462 = vrot.slane %v16, %v461
    %v463 = vadd.f32 %v443, %v462
    %v464 = vadd.f32 %v444, %v462
    %v465 = vadd.f32 %v445, %v462
    %v466 = vadd.f32 %v446, %v462
    %v467 = vadd.f32 %v447, %v462
    %v468 = vadd.f32 %v448, %v462
    %v469 = vadd.f32 %v449, %v462
    %v470 = vadd.f32 %v450, %v462
    %v471 = vadd.f32 %v451, %v462
    %v472 = vadd.f32 %v452, %v462
    %v473 = vadd.f32 %v453, %v462
    %v474 = vadd.f32 %v454, %v462
    %v475 = vadd.f32 %v455, %v462
    %v476 = vadd.f32 %v456, %v462
    %v477 = vadd.f32 %v457, %v462
    %v478 = vadd.f32 %v458, %v462
    %v479 = vpack.c.bf16 %v464, %v463
    %v480 = vpack.c.bf16 %v466, %v465
    %v481 = vpack.c.bf16 %v468, %v467
    %v482 = vpack.c.bf16 %v470, %v469
    %v483 = vpack.c.bf16 %v472, %v471
    %v484 = vpack.c.bf16 %v474, %v473
    %v485 = vpack.c.bf16 %v476, %v475
    %v486 = vpack.c.bf16 %v478, %v477
    %v495 = vunpack.c.l.b16 %v479
    %v496 = vunpack.c.h.b16 %v479
    %v497 = vunpack.c.l.b16 %v480
    %v498 = vunpack.c.h.b16 %v480
    %v499 = vunpack.c.l.b16 %v481
    %v500 = vunpack.c.h.b16 %v481
    %v501 = vunpack.c.l.b16 %v482
    %v502 = vunpack.c.h.b16 %v482
    %v503 = vunpack.c.l.b16 %v483
    %v504 = vunpack.c.h.b16 %v483
    %v505 = vunpack.c.l.b16 %v484
    %v506 = vunpack.c.h.b16 %v484
    %v507 = vunpack.c.l.b16 %v485
    %v508 = vunpack.c.h.b16 %v485
    %v509 = vunpack.c.l.b16 %v486
    %v510 = vunpack.c.h.b16 %v486
    %v511 = vpack.c.b16 %v495, %v495
    %v512 = vpack.c.b16 %v496, %v496
    %v513 = vpack.c.b16 %v497, %v497
    %v514 = vpack.c.b16 %v498, %v498
    %v515 = vpack.c.b16 %v499, %v499
    %v516 = vpack.c.b16 %v500, %v500
    %v517 = vpack.c.b16 %v501, %v501
    %v518 = vpack.c.b16 %v502, %v502
    %v519 = vpack.c.b16 %v503, %v503
    %v520 = vpack.c.b16 %v504, %v504
    %v521 = vpack.c.b16 %v505, %v505
    %v522 = vpack.c.b16 %v506, %v506
    %v523 = vpack.c.b16 %v507, %v507
    %v524 = vpack.c.b16 %v508, %v508
    %v525 = vpack.c.b16 %v509, %v509
    %v526 = vpack.c.b16 %v510, %v510
    %543 = vst [vmem:[#allocation2] sm:$0xf] %v511
    %544 = vst [vmem:[#allocation2 + $0x4] sm:$0xf] %v512
    %545 = vst [vmem:[#allocation2 + $0x8] sm:$0xf] %v513
    %546 = vst [vmem:[#allocation2 + $0xc] sm:$0xf] %v514
    %547 = vst [vmem:[#allocation2 + $0x10] sm:$0xf] %v515
    %548 = vst [vmem:[#allocation2 + $0x14] sm:$0xf] %v516
    %549 = vst [vmem:[#allocation2 + $0x18] sm:$0xf] %v517
    %550 = vst [vmem:[#allocation2 + $0x1c] sm:$0xf] %v518
    %551 = vst [vmem:[#allocation2 + $0x20] sm:$0xf] %v519
    %552 = vst [vmem:[#allocation2 + $0x24] sm:$0xf] %v520
    %553 = vst [vmem:[#allocation2 + $0x28] sm:$0xf] %v521
    %554 = vst [vmem:[#allocation2 + $0x2c] sm:$0xf] %v522
    %555 = vst [vmem:[#allocation2 + $0x30] sm:$0xf] %v523
    %556 = vst [vmem:[#allocation2 + $0x34] sm:$0xf] %v524
    %557 = vst [vmem:[#allocation2 + $0x38] sm:$0xf] %v525
    %558 = vst [vmem:[#allocation2 + $0x3c] sm:$0xf] %v526
    // Predicated region
    $region14: #{patch_conv_embed.1} parent=1 // pred_check
      _
    $region15: #{patch_conv_embed.1} parent=1 // pred_check_branch
      %560 = sbr.rel (0) target = $region17
    $region16: #{patch_conv_embed.1} parent=1 // pred_region
      %s562 = ssub.s32 1024, 1024
      %563 = vsyncadd [#allocation3], %s562
      %s564 = sshll.u32 [#allocation2], 4
      %s565 = int_to_ptr.vmem [resolvable:$true] %s564
      %570 = dma.vmem_to_hbm [thread:$0]  %s565, 1024, %s3, [#allocation3], 64, 64, 4
    $region17: #{patch_conv_embed.1} parent=1 // pred_fallthru
      _
    // Predicated region
    $region18: #{patch_conv_embed.1} parent=1 // pred_check
      _
    $region19: #{patch_conv_embed.1} parent=1 // pred_check_branch
      %572 = sbr.rel (0) target = $region21
    $region20: #{patch_conv_embed.1} parent=1 // pred_region
      %573 = dma.done [#allocation3], 1024
    $region21: #{patch_conv_embed.1} parent=1 // pred_fallthru
      _
    %574 = vsyncpa [#allocation3], 1

</llo_original>
